<compile_context>
chip_gen: v6e
topology: v6e:2x2x1
jax: 0.10.0
libtpu: 0.0.40
codegen_flags: <defaults>
</compile_context>

<pallas_src>
import functools
import math

import jax
import jax.numpy as jnp
from jax.experimental import pallas as pl
from jax.experimental.pallas import tpu as pltpu


# ----------------------------------------------------------------------------
# Small helpers
# ----------------------------------------------------------------------------

def _round_up(a, b):
    return ((a + b - 1) // b) * b


def _pick_tile(n, preferred, align):
    """Largest `align`-multiple divisor of n that is <= preferred, else n."""
    if n <= preferred:
        return n
    t = (preferred // align) * align
    while t >= align:
        if n % t == 0:
            return t
        t -= align
    return n


_VMEM_LIMIT = 64 * 1024 * 1024  # safe on v5e/v6e/v7x


# ----------------------------------------------------------------------------
# Tiled matmul kernels (nn.Linear, bias=False), optional fused residual add
# ----------------------------------------------------------------------------

def _matmul_kernel(x_ref, w_ref, o_ref, acc_ref):
    @pl.when(pl.program_id(2) == 0)
    def _():
        acc_ref[...] = jnp.zeros_like(acc_ref)

    acc_ref[...] += jax.lax.dot_general(
        x_ref[...], w_ref[...], (((1,), (1,)), ((), ())),
        preferred_element_type=jnp.float32)

    @pl.when(pl.program_id(2) == pl.num_programs(2) - 1)
    def _():
        o_ref[...] = acc_ref[...].astype(o_ref.dtype)


def _matmul_res_kernel(x_ref, w_ref, r_ref, o_ref, acc_ref):
    @pl.when(pl.program_id(2) == 0)
    def _():
        acc_ref[...] = jnp.zeros_like(acc_ref)

    acc_ref[...] += jax.lax.dot_general(
        x_ref[...], w_ref[...], (((1,), (1,)), ((), ())),
        preferred_element_type=jnp.float32)

    @pl.when(pl.program_id(2) == pl.num_programs(2) - 1)
    def _():
        o_ref[...] = (acc_ref[...] +
                      r_ref[...].astype(jnp.float32)).astype(o_ref.dtype)


def linear(x, w, residual=None, out_dtype=jnp.bfloat16,
           tm_pref=256, tn_pref=256, tk_pref=512):
    """x @ w.T with w stored as (Dout, Din); optional fused `+ residual`."""
    M, K = x.shape
    N, K2 = w.shape
    assert K == K2
    tm = _pick_tile(M, tm_pref, 8)
    tn = _pick_tile(N, tn_pref, 128)
    tk = _pick_tile(K, tk_pref, 128)
    grid = (M // tm, N // tn, K // tk)

    x_spec = pl.BlockSpec((tm, tk), lambda i, j, k: (i, k))
    w_spec = pl.BlockSpec((tn, tk), lambda i, j, k: (j, k))
    o_spec = pl.BlockSpec((tm, tn), lambda i, j, k: (i, j))

    if residual is None:
        kernel = _matmul_kernel
        in_specs = [x_spec, w_spec]
        args = (x, w)
    else:
        kernel = _matmul_res_kernel
        in_specs = [x_spec, w_spec,
                    pl.BlockSpec((tm, tn), lambda i, j, k: (i, j))]
        args = (x, w, residual)

    return pl.pallas_call(
        kernel,
        out_shape=jax.ShapeDtypeStruct((M, N), out_dtype),
        grid_spec=pltpu.PrefetchScalarGridSpec(
            num_scalar_prefetch=0, grid=grid,
            in_specs=in_specs, out_specs=o_spec,
            scratch_shapes=[pltpu.VMEM((tm, tn), jnp.float32)]),
        compiler_params=pltpu.CompilerParams(
            dimension_semantics=("parallel", "parallel", "arbitrary"),
            vmem_limit_bytes=_VMEM_LIMIT),
    )(*args)


# ----------------------------------------------------------------------------
# RMSNorm (tiled over token tiles)
# ----------------------------------------------------------------------------

def _rmsnorm_kernel(x_ref, w_ref, o_ref, *, eps):
    x = x_ref[...].astype(jnp.float32)
    ms = jnp.mean(x * x, axis=-1, keepdims=True)
    o_ref[...] = (x * jax.lax.rsqrt(ms + eps) *
                  w_ref[...].astype(jnp.float32)).astype(o_ref.dtype)


def rmsnorm(x, weight, eps, out_dtype=jnp.bfloat16):
    T, D = x.shape
    tm = _pick_tile(T, 256, 8)
    return pl.pallas_call(
        functools.partial(_rmsnorm_kernel, eps=eps),
        out_shape=jax.ShapeDtypeStruct((T, D), out_dtype),
        grid_spec=pltpu.PrefetchScalarGridSpec(
            num_scalar_prefetch=0, grid=(T // tm,),
            in_specs=[pl.BlockSpec((tm, D), lambda i: (i, 0)),
                      pl.BlockSpec((1, D), lambda i: (0, 0))],
            out_specs=pl.BlockSpec((tm, D), lambda i: (i, 0))),
        compiler_params=pltpu.CompilerParams(
            dimension_semantics=("parallel",)),
    )(x, weight.reshape(1, -1))


# ----------------------------------------------------------------------------
# Flash attention with GQA-in-index_map and block-diagonal causal masking
# ----------------------------------------------------------------------------

def _flash_kernel(q_ref, k_ref, v_ref, sq_ref, pq_ref, sk_ref, pk_ref,
                  o_ref, m_sc, l_sc, acc_sc, *, scale, causal):
    ki = pl.program_id(2)

    @pl.when(ki == 0)
    def _():
        m_sc[...] = jnp.full_like(m_sc, -1e30)
        l_sc[...] = jnp.zeros_like(l_sc)
        acc_sc[...] = jnp.zeros_like(acc_sc)

    s = jax.lax.dot_general(
        q_ref[...], k_ref[...], (((1,), (1,)), ((), ())),
        preferred_element_type=jnp.float32) * scale            # (tq, tkv)

    valid = sk_ref[...] >= 0                                   # exclude pad kv
    if causal:
        valid = jnp.logical_and(
            valid,
            jnp.logical_and(sq_ref[...] == sk_ref[...],        # same sequence
                            pk_ref[...] <= pq_ref[...]))       # causal
    s = jnp.where(valid, s, -1e30)

    m_prev = m_sc[...]
    m_new = jnp.maximum(m_prev, jnp.max(s, axis=-1, keepdims=True))
    alpha = jnp.exp(m_prev - m_new)
    p = jnp.where(valid, jnp.exp(s - m_new), 0.0)
    l_sc[...] = alpha * l_sc[...] + jnp.sum(p, axis=-1, keepdims=True)
    acc_sc[...] = alpha * acc_sc[...] + jnp.dot(
        p.astype(jnp.bfloat16), v_ref[...], preferred_element_type=jnp.float32)
    m_sc[...] = m_new

    @pl.when(ki == pl.num_programs(2) - 1)
    def _():
        o_ref[...] = (acc_sc[...] *
                      pl.reciprocal(l_sc[...], approx=True)).astype(o_ref.dtype)


def flash_attention(q, k, v, segments, positions, n_heads, n_kv_heads,
                    head_dim, causal=True):
    """q: (T, n_heads*hd); k, v: (T, n_kv_heads*hd); bf16. Returns (T, n_heads*hd)."""
    Tp = q.shape[0]
    repeats = n_heads // n_kv_heads
    scale = 1.0 / math.sqrt(head_dim)
    assert head_dim % 128 == 0, "kernel assumes lane-aligned head_dim"

    tq = _pick_tile(Tp, 256, 8)
    tkv = _pick_tile(Tp, 512, 128)

    seg_col = segments.reshape(Tp, 1)
    pos_col = positions.reshape(Tp, 1)
    seg_row = segments.reshape(1, Tp)
    pos_row = positions.reshape(1, Tp)

    grid = (n_heads, Tp // tq, Tp // tkv)

    def q_map(h, qi, ki):
        return (qi, h)

    def kv_map(h, qi, ki):
        return (ki, h // repeats)          # GQA: no jnp.repeat of K/V

    def col_map(h, qi, ki):
        return (qi, 0)

    def row_map(h, qi, ki):
        return (0, ki)

    return pl.pallas_call(
        functools.partial(_flash_kernel, scale=scale, causal=causal),
        out_shape=jax.ShapeDtypeStruct((Tp, n_heads * head_dim), jnp.bfloat16),
        grid_spec=pltpu.PrefetchScalarGridSpec(
            num_scalar_prefetch=0,
            grid=grid,
            in_specs=[
                pl.BlockSpec((tq, head_dim), q_map),
                pl.BlockSpec((tkv, head_dim), kv_map),
                pl.BlockSpec((tkv, head_dim), kv_map),
                pl.BlockSpec((tq, 1), col_map),
                pl.BlockSpec((tq, 1), col_map),
                pl.BlockSpec((1, tkv), row_map),
                pl.BlockSpec((1, tkv), row_map),
            ],
            out_specs=pl.BlockSpec((tq, head_dim), q_map),
            scratch_shapes=[pltpu.VMEM((tq, 1), jnp.float32),
                            pltpu.VMEM((tq, 1), jnp.float32),
                            pltpu.VMEM((tq, head_dim), jnp.float32)]),
        compiler_params=pltpu.CompilerParams(
            dimension_semantics=("parallel", "parallel", "arbitrary"),
            vmem_limit_bytes=_VMEM_LIMIT),
    )(q, k, v, seg_col, pos_col, seg_row, pos_row)


# ----------------------------------------------------------------------------
# Grouped MoE (token-sorted, scalar-prefetched expert ids)
# ----------------------------------------------------------------------------

def _moe_kernel(te_ref, xs_ref, sw_ref, w1_ref, w3_ref, w2_ref, o_ref, acc_ref):
    del te_ref  # only consumed by the index maps
    hh = pl.program_id(1)

    @pl.when(hh == 0)
    def _():
        acc_ref[...] = jnp.zeros_like(acc_ref)

    x = xs_ref[...]                      # (tm, D) bf16
    w1 = w1_ref[0]                       # (th, D)
    w3 = w3_ref[0]                       # (th, D)
    w2 = w2_ref[0]                       # (D, th)
    h1 = jax.lax.dot_general(x, w1, (((1,), (1,)), ((), ())),
                             preferred_element_type=jnp.float32)
    h3 = jax.lax.dot_general(x, w3, (((1,), (1,)), ((), ())),
                             preferred_element_type=jnp.float32)
    hact = (jax.nn.silu(h1) * h3).astype(jnp.bfloat16)
    acc_ref[...] += jax.lax.dot_general(hact, w2, (((1,), (1,)), ((), ())),
                                        preferred_element_type=jnp.float32)

    @pl.when(hh == pl.num_programs(1) - 1)
    def _():
        o_ref[...] = sw_ref[...] * acc_ref[...]


def moe_layer(x, h_residual, gate_w, w1, w2, w3, top_k, num_experts):
    """Sparse MoE SwiGLU with fused residual add. x, h_residual: (Tp, D) bf16."""
    Tp, D = x.shape
    E = num_experts
    Hd = w1.shape[1]

    # --- routing (plain JAX glue) ---
    gate_logits = linear(x, gate_w, out_dtype=jnp.float32)        # (Tp, E)
    weights, selected = jax.lax.top_k(gate_logits, top_k)
    weights = jax.nn.softmax(weights, axis=-1)                    # (Tp, top_k)

    A = Tp * top_k
    tm = min(128, max(8, _round_up(max(1, A // E), 8)))

    token_idx = jnp.repeat(jnp.arange(Tp, dtype=jnp.int32), top_k)
    expert_idx = selected.reshape(-1).astype(jnp.int32)
    w_flat = weights.reshape(-1)

    order = jnp.argsort(expert_idx)
    se = expert_idx[order]
    st = token_idx[order]
    sw_sorted = w_flat[order]

    sizes = jnp.zeros((E,), jnp.int32).at[expert_idx].add(1)
    offsets = jnp.concatenate([jnp.zeros((1,), jnp.int32),
                               jnp.cumsum(sizes)[:-1]])
    padded_sizes = ((sizes + tm - 1) // tm) * tm
    padded_cum = jnp.cumsum(padded_sizes)
    padded_offsets = jnp.concatenate([jnp.zeros((1,), jnp.int32),
                                      padded_cum[:-1]])
    rank = jnp.arange(A, dtype=jnp.int32) - offsets[se]
    dest = padded_offsets[se] + rank                              # (A,)

    L = _round_up(A, tm) + E * tm                                 # static bound
    num_tiles = L // tm

    xs = jnp.zeros((L, D), x.dtype).at[dest].set(x[st])
    sw = jnp.zeros((L, 1), jnp.float32).at[dest].set(sw_sorted[:, None])
    out_tok = jnp.full((L,), Tp, jnp.int32).at[dest].set(st)      # Tp == OOB pad

    tile_start = jnp.arange(num_tiles, dtype=jnp.int32) * tm
    tile_expert = jnp.minimum(
        jnp.searchsorted(padded_cum, tile_start, side='right'),
        E - 1).astype(jnp.int32)

    th = _pick_tile(Hd, 256, 128)
    grid = (num_tiles, Hd // th)

    ys = pl.pallas_call(
        _moe_kernel,
        out_shape=jax.ShapeDtypeStruct((L, D), jnp.float32),
        grid_spec=pltpu.PrefetchScalarGridSpec(
            num_scalar_prefetch=1,
            grid=grid,
            in_specs=[
                pl.BlockSpec((tm, D), lambda t, hh, te: (t, 0)),
                pl.BlockSpec((tm, 1), lambda t, hh, te: (t, 0)),
                pl.BlockSpec((1, th, D), lambda t, hh, te: (te[t], hh, 0)),
                pl.BlockSpec((1, th, D), lambda t, hh, te: (te[t], hh, 0)),
                pl.BlockSpec((1, D, th), lambda t, hh, te: (te[t], 0, hh)),
            ],
            out_specs=pl.BlockSpec((tm, D), lambda t, hh, te: (t, 0)),
            scratch_shapes=[pltpu.VMEM((tm, D), jnp.float32)]),
        compiler_params=pltpu.CompilerParams(
            dimension_semantics=("parallel", "arbitrary"),
            vmem_limit_bytes=_VMEM_LIMIT),
    )(tile_expert, xs, sw, w1, w3, w2)

    # Scatter expert outputs back to tokens; residual add fused via the base.
    out = h_residual.astype(jnp.float32).at[out_tok].add(ys, mode='drop')
    return out.astype(jnp.bfloat16)


# ----------------------------------------------------------------------------
# Plain-JAX glue (RoPE, embedding gather)
# ----------------------------------------------------------------------------

def rope_tables(positions, head_dim, theta):
    inv_freq = 1.0 / (theta ** (jnp.arange(0, head_dim, 2, dtype=jnp.float32)
                                / head_dim))
    angles = positions.astype(jnp.float32)[:, None] * inv_freq[None, :]
    return jnp.cos(angles), jnp.sin(angles)          # (T, hd//2) each


def apply_rope(x, cos, sin, n_heads, head_dim):
    """RoPE on de-interleaved (half-rotate) per-head layout. x: (T, n_heads*hd)."""
    T = x.shape[0]
    half = head_dim // 2
    xf = x.reshape(T, n_heads, head_dim).astype(jnp.float32)
    xr, xi = xf[..., :half], xf[..., half:]
    c, s = cos[:, None, :], sin[:, None, :]
    out = jnp.concatenate([xr * c - xi * s, xr * s + xi * c], axis=-1)
    return out.reshape(T, n_heads * head_dim).astype(jnp.bfloat16)


# ----------------------------------------------------------------------------
# Full model forward (cache=None, single pipeline rank)
# ----------------------------------------------------------------------------

def transformer_forward(params, cfg, input_ids, seqlens):
    T = int(input_ids.shape[0])
    assert sum(seqlens) == T
    nh, nkv, hd = cfg['n_heads'], cfg['n_kv_heads'], cfg['head_dim']
    eps = cfg['norm_eps']
    theta = 1000000.0 if cfg['sliding_window'] is None else 10000.0
    # NOTE: the literal cache=None reference path passes mask=None (unmasked);
    # per the performance-review correctness note we default to a
    # block-diagonal causal mask built from seqlens/positions.
    causal = bool(cfg.get('block_diag_causal_mask', True))

    T_pad = _round_up(T, 8)
    pad = T_pad - T
    pos_list = [jnp.arange(s, dtype=jnp.int32) for s in seqlens]
    seg_list = [jnp.full((s,), i, jnp.int32) for i, s in enumerate(seqlens)]
    ids = input_ids.astype(jnp.int32)
    if pad:
        pos_list.append(jnp.zeros((pad,), jnp.int32))
        seg_list.append(jnp.full((pad,), -1, jnp.int32))   # pad segment
        ids = jnp.concatenate([ids, jnp.zeros((pad,), jnp.int32)])
    positions = jnp.concatenate(pos_list)                  # SimpleInputMetadata
    segments = jnp.concatenate(seg_list)

    cos, sin = rope_tables(positions, hd, theta)

    h = jnp.take(params['tok_embeddings'], ids, axis=0)    # (T_pad, dim) bf16

    for lp in params['layers']:
        # --- attention block ---
        x = rmsnorm(h, lp['attention_norm'], eps)
        xq = apply_rope(linear(x, lp['wq']), cos, sin, nh, hd)
        xk = apply_rope(linear(x, lp['wk']), cos, sin, nkv, hd)
        xv = linear(x, lp['wv'])
        attn = flash_attention(xq, xk, xv, segments, positions,
                               nh, nkv, hd, causal=causal)
        h = linear(attn, lp['wo'], residual=h)             # fused residual add

        # --- MoE feed-forward block ---
        x2 = rmsnorm(h, lp['ffn_norm'], eps)
        h = moe_layer(x2, h, lp['gate'], lp['w1'], lp['w2'], lp['w3'],
                      cfg['num_experts_per_tok'], cfg['num_experts'])

    hn = rmsnorm(h, params['norm'], eps)
    logits = linear(hn, params['output'], out_dtype=jnp.float32)
    return logits[:T]


# ----------------------------------------------------------------------------
# Deterministic parameter init (reference layout) + Pallas-ready prep
# ----------------------------------------------------------------------------

def init_params(key, cfg):
    dim, hidden = cfg['dim'], cfg['hidden_dim']
    nh, nkv, hd = cfg['n_heads'], cfg['n_kv_heads'], cfg['head_dim']
    E, V, L = cfg['num_experts'], cfg['vocab_size'], cfg['n_layers']

    def nrm(k, shape, scale=0.05):
        return scale * jax.random.normal(k, shape, dtype=jnp.float32)

    keys = iter(jax.random.split(key, 2 + 8 * L))
    params = {
        'tok_embeddings': nrm(next(keys), (V, dim)),
        'norm': jnp.ones((dim,), jnp.float32),
        'output': nrm(next(keys), (V, dim)),
        'layers': [],
    }
    for _ in range(L):
        params['layers'].append({
            'attention_norm': jnp.ones((dim,), jnp.float32),
            'ffn_norm': jnp.ones((dim,), jnp.float32),
            'wq': nrm(next(keys), (nh * hd, dim)),
            'wk': nrm(next(keys), (nkv * hd, dim)),
            'wv': nrm(next(keys), (nkv * hd, dim)),
            'wo': nrm(next(keys), (dim, nh * hd)),
            'gate': nrm(next(keys), (E, dim)),
            'w1': nrm(next(keys), (E, hidden, dim)),
            'w2': nrm(next(keys), (E, dim, hidden)),
            'w3': nrm(next(keys), (E, hidden, dim)),
        })
    return params


def prepare_params(params, cfg):
    """Permute wq/wk rows to the de-interleaved RoPE layout; cast to bf16."""
    nh, nkv, hd = cfg['n_heads'], cfg['n_kv_heads'], cfg['head_dim']
    idx = jnp.concatenate([jnp.arange(0, hd, 2), jnp.arange(1, hd, 2)])

    def deint(w, heads):
        return w.reshape(heads, hd, -1)[:, idx, :].reshape(w.shape)

    out = {
        'tok_embeddings': params['tok_embeddings'].astype(jnp.bfloat16),
        'norm': params['norm'],
        'output': params['output'].astype(jnp.bfloat16),
        'layers': [],
    }
    for lp in params['layers']:
        out['layers'].append({
            'attention_norm': lp['attention_norm'],
            'ffn_norm': lp['ffn_norm'],
            'wq': deint(lp['wq'], nh).astype(jnp.bfloat16),
            'wk': deint(lp['wk'], nkv).astype(jnp.bfloat16),
            'wv': lp['wv'].astype(jnp.bfloat16),
            'wo': lp['wo'].astype(jnp.bfloat16),
            'gate': lp['gate'].astype(jnp.bfloat16),
            'w1': lp['w1'].astype(jnp.bfloat16),
            'w2': lp['w2'].astype(jnp.bfloat16),
            'w3': lp['w3'].astype(jnp.bfloat16),
        })
    return out


# ----------------------------------------------------------------------------
# main
# ----------------------------------------------------------------------------

if __name__ == "__main__":
    cfg = dict(
        dim=128, n_layers=2, n_heads=4, n_kv_heads=2, head_dim=128,
        vocab_size=512, hidden_dim=512, norm_eps=1e-5,
        num_experts=4, num_experts_per_tok=2, sliding_window=4096,
        block_diag_causal_mask=True,
    )
    key = jax.random.PRNGKey(0)
    pkey, ikey = jax.random.split(key)
    params = prepare_params(init_params(pkey, cfg), cfg)

    seqlens = [9, 7]                       # two sequences, 16 tokens total
    T = sum(seqlens)
    input_ids = jax.random.randint(ikey, (T,), 0, cfg['vocab_size'],
                                   dtype=jnp.int32)

    logits = transformer_forward(params, cfg, input_ids, seqlens)
    logits = jax.block_until_ready(logits)
    assert logits.shape == (T, cfg['vocab_size'])
    assert logits.dtype == jnp.float32
    assert bool(jnp.all(jnp.isfinite(logits)))
    print("KERNEL_OK")
</pallas_src>

<mosaic_0001>
module attributes {stable_mosaic.version = 11 : i64} {
  func.func @_rmsnorm_kernel(%arg0: i32, %arg1: memref<16x128xbf16, #tpu.memory_space<vmem>>, %arg2: memref<1x128xf32, #tpu.memory_space<vmem>>, %arg3: memref<16x128xbf16, #tpu.memory_space<vmem>>) attributes {dimension_semantics = [#tpu.dimension_semantics<parallel>], iteration_bounds = array<i64: 1>, scalar_prefetch = 0 : i64, scratch_operands = 0 : i64, tpu.core_type = #tpu.core_type<tc>, window_params = [{transform_indices = @transform_0, window_bounds = array<i64: 16, 128>}, {pipeline_mode = #tpu.pipeline_mode<synchronous>, transform_indices = @transform_1, window_bounds = array<i64: 1, 128>}, {transform_indices = @transform_2, window_bounds = array<i64: 16, 128>}]} {
    %c0 = arith.constant 0 : index
    %c0_0 = arith.constant 0 : index
    %0 = vector.load %arg1[%c0, %c0_0] : memref<16x128xbf16, #tpu.memory_space<vmem>>, vector<16x128xbf16>
    %1 = arith.extf %0 : vector<16x128xbf16> to vector<16x128xf32>
    %2 = arith.mulf %1, %1 : vector<16x128xf32>
    %cst = arith.constant dense<0.000000e+00> : vector<16xf32>
    %3 = vector.multi_reduction <add>, %2, %cst [1] : vector<16x128xf32> to vector<16xf32>
    %4 = vector.shape_cast %3 : vector<16xf32> to vector<16x1xf32>
    %cst_1 = arith.constant 1.280000e+02 : f32
    %5 = vector.broadcast %cst_1 : f32 to vector<16x1xf32>
    %6 = arith.divf %4, %5 : vector<16x1xf32>
    %cst_2 = arith.constant 9.99999974E-6 : f32
    %7 = vector.broadcast %cst_2 : f32 to vector<16x1xf32>
    %8 = arith.addf %6, %7 : vector<16x1xf32>
    %9 = math.rsqrt %8 : vector<16x1xf32>
    %10 = vector.broadcast %9 : vector<16x1xf32> to vector<16x128xf32>
    %11 = arith.mulf %1, %10 : vector<16x128xf32>
    %c0_3 = arith.constant 0 : index
    %c0_4 = arith.constant 0 : index
    %12 = vector.load %arg2[%c0_3, %c0_4] : memref<1x128xf32, #tpu.memory_space<vmem>>, vector<1x128xf32>
    %13 = vector.broadcast %12 : vector<1x128xf32> to vector<16x128xf32>
    %14 = arith.mulf %11, %13 : vector<16x128xf32>
    %15 = arith.truncf %14 : vector<16x128xf32> to vector<16x128xbf16>
    %c0_5 = arith.constant 0 : index
    %c0_6 = arith.constant 0 : index
    %16 = vector.load %arg3[%c0_5, %c0_6] : memref<16x128xbf16, #tpu.memory_space<vmem>>, vector<16x128xbf16>
    tpu.vector_store %arg3[%c0_5, %c0_6], %15 {strides = array<i32>} : memref<16x128xbf16, #tpu.memory_space<vmem>>, vector<16x128xbf16>,
    return
  }
  func.func @transform_0(%arg0: i32) -> (i32, i32) {
    %c0_i32 = arith.constant 0 : i32
    %c0_i32_0 = arith.constant 0 : i32
    return %arg0, %c0_i32 : i32, i32
  }
  func.func @transform_1(%arg0: i32) -> (i32, i32) {
    %c0_i32 = arith.constant 0 : i32
    %c0_i32_0 = arith.constant 0 : i32
    %c0_i32_1 = arith.constant 0 : i32
    return %c0_i32, %c0_i32_0 : i32, i32
  }
  func.func @transform_2(%arg0: i32) -> (i32, i32) {
    %c0_i32 = arith.constant 0 : i32
    %c0_i32_0 = arith.constant 0 : i32
    return %arg0, %c0_i32 : i32, i32
  }
}

</mosaic_0001>

<llo_original>
// kernel: tpu_custom_call.1
$region0: #{tpu_custom_call.1}
  #allocation0 [shape = 'u32[]', space=smem, size = 0x4, offset = 0x4, fixed_abs, tag = 'smem constant byte address 0x4 - core index']
  #allocation1 [shape = 'u32[144,128]{1,0:T(1,128)}', space=vmem, size = 0x12000, scoped, tag = 'internal scratch']
  %s0 = inlined_call_operand.hbm [shape: bf16[16,128], index: 0, kind: input, shape index: {}]
  %s1 = inlined_call_operand.vmem [shape: f32[1,128], index: 1, kind: input, shape index: {}]
  %s2 = inlined_call_operand.hbm [shape: bf16[16,128], index: 2, kind: output, shape index: {}]
  %s3 = sld [smem:[#allocation0]]
  $region22: #{tpu_custom_call.1} parent=0
    _
  %s5 = ssub.s32 1, %s3
  %s6 = scalar_select 0, %s5, %s3
  $region1: #{tpu_custom_call.1} parent=0
    #allocation2 [shape = 'u8[4096]{0}', space=vmem, size = 0x1000, scoped, tag = 'input window, operand 0, single buffered']
    #allocation3 [shape = 's32[1]{0}', space=sflag, size = 0x4, scoped, tag = 'scoped memory for tpu_custom_call.1']
    #allocation4 [shape = 's32[1]{0}', space=sflag, size = 0x4, scoped, tag = 'scoped memory for tpu_custom_call.1']
    #allocation5 [shape = 'u8[4096]{0}', space=vmem, size = 0x1000, scoped, tag = 'output window, operand 0, single buffered']
    %7 = vsyncpa [#allocation3], 0
    %8 = vsyncpa [#allocation4], 0
    // Predicated region
    $region2: #{tpu_custom_call.1} parent=1 // pred_check
      _
    $region3: #{tpu_custom_call.1} parent=1 // pred_check_branch
      %10 = sbr.rel (0) target = $region5
    $region4: #{tpu_custom_call.1} parent=1 // pred_region
      %s12 = ssub.s32 128, 128
      %13 = vsyncadd [#allocation3], %s12
      %s14 = sshll.u32 [#allocation2], 4
      %s15 = int_to_ptr.vmem [resolvable:$true] %s14
      %20 = dma.hbm_to_vmem [thread:$0]  %s0, 128, %s15, [#allocation3], 64, 64, 4
    $region5: #{tpu_custom_call.1} parent=1 // pred_fallthru
      _
    // Predicated region
    $region6: #{tpu_custom_call.1} parent=1 // pred_check
      _
    $region7: #{tpu_custom_call.1} parent=1 // pred_check_branch
      %22 = sbr.rel (0) target = $region9
    $region8: #{tpu_custom_call.1} parent=1 // pred_region
      _
    $region9: #{tpu_custom_call.1} parent=1 // pred_fallthru
      _
    // Predicated region
    $region10: #{tpu_custom_call.1} parent=1 // pred_check
      _
    $region11: #{tpu_custom_call.1} parent=1 // pred_check_branch
      %24 = sbr.rel (0) target = $region13
    $region12: #{tpu_custom_call.1} parent=1 // pred_region
      %25 = dma.done [#allocation3], 128
    $region13: #{tpu_custom_call.1} parent=1 // pred_fallthru
      _
    %v26 = vld [vmem:[#allocation2] sm:$0xf]
    %v27 = vld [vmem:[#allocation2 + $0x4] sm:$0xf]
    %v28 = vunpack.c.l.bf16 %v26
    %v29 = vunpack.c.l.bf16 %v27
    %v30 = vmul.f32 %v28, %v28
    %v31 = vmul.f32 %v29, %v29
    %32 = vadd.xlane.f32.xlu0 %v30
    %v33 = vpop.xlane.xlu0 %32
    %34 = vadd.xlane.f32.xlu0 %v31
    %v35 = vpop.xlane.xlu0 %34
    %v36 = vrcp.pop 128.0
    %v37 = vmul.f32 %v33, %v36
    %v38 = vmul.f32 %v35, %v36
    %v39 = vadd.f32 %v37, 1e-05
    %v40 = vadd.f32 %v38, 1e-05
    %v41 = vrsqrt.pop %v39
    %v42 = vrsqrt.pop %v40
    %v43 = vmul.f32 %v28, %v41
    %v44 = vmul.f32 %v29, %v42
    %v45 = vld [vmem:[%s1] sm:$0x1]
    %v47 = vlaneseq
    %v48 = vshrl.u32 %v47, 7
    %v49 = vsub.s32 0, %v48
    %v50 = vrot.slane %v45, %v49
    %v52 = vmul.f32 %v43, %v50
    %v53 = vmul.f32 %v44, %v50
    %v54 = vpack.c.bf16 %v53, %v52
    %v56 = vunpack.c.l.b16 %v54
    %v57 = vunpack.c.h.b16 %v54
    %v58 = vpack.c.b16 %v56, %v56
    %v59 = vpack.c.b16 %v57, %v57
    %62 = vst [vmem:[#allocation5] sm:$0xf] %v58
    %63 = vst [vmem:[#allocation5 + $0x4] sm:$0xf] %v59
    // Predicated region
    $region14: #{tpu_custom_call.1} parent=1 // pred_check
      _
    $region15: #{tpu_custom_call.1} parent=1 // pred_check_branch
      %65 = sbr.rel (0) target = $region17
    $region16: #{tpu_custom_call.1} parent=1 // pred_region
      %s67 = ssub.s32 128, 128
      %68 = vsyncadd [#allocation4], %s67
      %s69 = sshll.u32 [#allocation5], 4
      %s70 = int_to_ptr.vmem [resolvable:$true] %s69
      %75 = dma.vmem_to_hbm [thread:$0]  %s70, 128, %s2, [#allocation4], 64, 64, 4
    $region17: #{tpu_custom_call.1} parent=1 // pred_fallthru
      _
    // Predicated region
    $region18: #{tpu_custom_call.1} parent=1 // pred_check
      _
    $region19: #{tpu_custom_call.1} parent=1 // pred_check_branch
      %77 = sbr.rel (0) target = $region21
    $region20: #{tpu_custom_call.1} parent=1 // pred_region
      %78 = dma.done [#allocation4], 128
    $region21: #{tpu_custom_call.1} parent=1 // pred_fallthru
      _
    %79 = vsyncpa [#allocation3], 1
    %80 = vsyncpa [#allocation4], 1

</llo_original>
